<compile_context>
chip_gen: v5e
topology: v5e:2x2
jax: 0.10.0
libtpu: 0.0.40
codegen_flags: <defaults>
</compile_context>

<pallas_src>
import math

import jax
import jax.numpy as jnp
from jax.experimental import pallas as pl
from jax.experimental.pallas import tpu as pltpu


def make_qnet_kernel(num_layers: int):
    """Kernel body for a SAC Q-network MLP with `num_layers` Linear layers.

    Ref order:
      (x, a,
       w0_x, w0_a, b0,                  # layer 0, weight pre-split (no concat)
       w1, b1, ..., w_{L-2}, b_{L-2},   # hidden layers
       w_last_row, b_last,              # final layer as a (1, hidden) row
       out)
    ReLU after every layer except the last (matches the PyTorch loop).
    """
    assert num_layers >= 2, "expects q_depth >= 1 (at least one hidden layer)"

    def kernel(x_ref, a_ref, *refs):
        o_ref = refs[-1]
        p = refs[:-1]

        # ---- Layer 0: concat folded into a split matmul (bf16 in, f32 acc) --
        w0_x, w0_a, b0 = p[0], p[1], p[2]
        h = (
            jnp.dot(x_ref[...].astype(jnp.bfloat16), w0_x[...],
                    preferred_element_type=jnp.float32)
            + jnp.dot(a_ref[...].astype(jnp.bfloat16), w0_a[...],
                      preferred_element_type=jnp.float32)
            + b0[...]
        )
        h = jnp.maximum(h, 0.0)

        # ---- Hidden layers 1 .. L-2 -----------------------------------------
        idx = 3
        for _ in range(1, num_layers - 1):
            w, b = p[idx], p[idx + 1]
            idx += 2
            h = jnp.dot(h.astype(jnp.bfloat16), w[...],
                        preferred_element_type=jnp.float32) + b[...]
            h = jnp.maximum(h, 0.0)

        # ---- Final layer: (hidden -> 1) as a VPU/XLU reduction (f32) ---------
        w_last, b_last = p[idx], p[idx + 1]
        q = jnp.sum(h * w_last[...], axis=-1, keepdims=True) + b_last[...]
        o_ref[...] = q.astype(o_ref.dtype)

    return kernel


def _flatten_params(params, obs_dim):
    """Reorganize [(W, b)] with W:[in,out] into the kernel's flat ref layout.

    Layer-0 weight is split into obs / act halves; matmul weights go to bf16;
    biases and the final weight row stay f32 (epilogue math in f32).
    """
    w0, b0 = params[0]
    flat = [
        w0[:obs_dim].astype(jnp.bfloat16),          # (obs_dim, hidden)
        w0[obs_dim:].astype(jnp.bfloat16),          # (act_dim, hidden)
        b0.astype(jnp.float32).reshape(1, -1),      # (1, hidden)
    ]
    for w, b in params[1:-1]:
        flat.append(w.astype(jnp.bfloat16))         # (hidden, hidden)
        flat.append(b.astype(jnp.float32).reshape(1, -1))
    w_last, b_last = params[-1]
    flat.append(w_last.astype(jnp.float32).reshape(1, -1))   # (1, hidden) row
    flat.append(b_last.astype(jnp.float32).reshape(1, 1))    # (1, 1)
    return flat


def soft_q_forward(x, a, params, *, batch_tile=256):
    """Pallas forward: q = MLP(concat([x, a], axis=1)), concat fused in-kernel.

    x:      [B, obs_dim]  (cast to f32, mirroring PyTorch .float())
    a:      [B, act_dim]
    params: list of (W, b) with W: [in, out], b: [out]
    returns [B, 1] float32
    """
    x = x.astype(jnp.float32)
    a = a.astype(jnp.float32)
    B, obs_dim = x.shape
    act_dim = a.shape[1]

    # Grid over batch rows; weights stay resident (constant index_map).
    if B % batch_tile != 0:
        batch_tile = B  # single full-batch block for small / ragged batches
    grid = (B // batch_tile,)

    flat = _flatten_params(params, obs_dim)
    kernel = make_qnet_kernel(len(params))

    def act_spec(cols):
        return pl.BlockSpec((batch_tile, cols), lambda i: (i, 0))

    def const_spec(arr):
        return pl.BlockSpec(arr.shape, lambda i: (0, 0))

    in_specs = [act_spec(obs_dim), act_spec(act_dim)] + [const_spec(w) for w in flat]

    return pl.pallas_call(
        kernel,
        out_shape=jax.ShapeDtypeStruct((B, 1), jnp.float32),
        grid=grid,
        in_specs=in_specs,
        out_specs=pl.BlockSpec((batch_tile, 1), lambda i: (i, 0)),
        compiler_params=pltpu.CompilerParams(
            dimension_semantics=("parallel",)),
    )(x, a, *flat)


def init_soft_q_params(key, obs_dim, act_dim, q_depth, hidden=256):
    """Deterministic init mirroring nn.Linear defaults:
    W, b ~ U(-1/sqrt(fan_in), 1/sqrt(fan_in)).  W stored as [in, out]."""
    input_dim = obs_dim + act_dim
    in_dims = [input_dim] + [hidden] * q_depth
    out_dims = [hidden] * q_depth + [1]

    params = []
    for in_d, out_d in zip(in_dims, out_dims):
        key, kw, kb = jax.random.split(key, 3)
        bound = 1.0 / math.sqrt(in_d)
        w = jax.random.uniform(kw, (in_d, out_d), jnp.float32, -bound, bound)
        b = jax.random.uniform(kb, (out_d,), jnp.float32, -bound, bound)
        params.append((w, b))
    return params


def reference_forward(x, a, params):
    """Pure-JAX f32 reference for correctness checking."""
    h = jnp.concatenate([x.astype(jnp.float32), a.astype(jnp.float32)], axis=1)
    for i, (w, b) in enumerate(params):
        h = h @ w + b
        if i < len(params) - 1:
            h = jnp.maximum(h, 0.0)
    return h


if __name__ == "__main__":
    # Small shapes consistent with the module: obs_dim=16, act_dim=8,
    # q_depth=2 hidden layers of 256, batch=8.
    B, OBS_DIM, ACT_DIM, Q_DEPTH = 8, 16, 8, 2

    key = jax.random.PRNGKey(0)
    k_obs, k_act, k_params = jax.random.split(key, 3)

    x = jax.random.normal(k_obs, (B, OBS_DIM), jnp.float32)
    a = jax.random.normal(k_act, (B, ACT_DIM), jnp.float32)
    params = init_soft_q_params(k_params, OBS_DIM, ACT_DIM, Q_DEPTH)

    q = soft_q_forward(x, a, params)
    q = jax.block_until_ready(q)

    q_ref = reference_forward(x, a, params)
    assert q.shape == (B, 1), q.shape
    # Matmul inputs are bf16 (f32 accumulation), so tolerance is loosened
    # relative to a pure-f32 comparison.
    assert jnp.allclose(q, q_ref, atol=5e-2, rtol=5e-2), (q, q_ref)

    print("KERNEL_OK")
</pallas_src>

<mosaic_0001>
module attributes {stable_mosaic.version = 11 : i64} {
  func.func @kernel(%arg0: i32, %arg1: memref<8x16xf32, #tpu.memory_space<vmem>>, %arg2: memref<8x8xf32, #tpu.memory_space<vmem>>, %arg3: memref<16x256xbf16, #tpu.memory_space<vmem>>, %arg4: memref<8x256xbf16, #tpu.memory_space<vmem>>, %arg5: memref<1x256xf32, #tpu.memory_space<vmem>>, %arg6: memref<256x256xbf16, #tpu.memory_space<vmem>>, %arg7: memref<1x256xf32, #tpu.memory_space<vmem>>, %arg8: memref<1x256xf32, #tpu.memory_space<vmem>>, %arg9: memref<1x1xf32, #tpu.memory_space<vmem>>, %arg10: memref<8x1xf32, #tpu.memory_space<vmem>>) attributes {dimension_semantics = [#tpu.dimension_semantics<parallel>], iteration_bounds = array<i64: 1>, scalar_prefetch = 0 : i64, scratch_operands = 0 : i64, tpu.core_type = #tpu.core_type<tc>, window_params = [{transform_indices = @transform_0, window_bounds = array<i64: 8, 16>}, {transform_indices = @transform_1, window_bounds = array<i64: 8, 8>}, {pipeline_mode = #tpu.pipeline_mode<synchronous>, transform_indices = @transform_2, window_bounds = array<i64: 16, 256>}, {pipeline_mode = #tpu.pipeline_mode<synchronous>, transform_indices = @transform_3, window_bounds = array<i64: 8, 256>}, {pipeline_mode = #tpu.pipeline_mode<synchronous>, transform_indices = @transform_4, window_bounds = array<i64: 1, 256>}, {pipeline_mode = #tpu.pipeline_mode<synchronous>, transform_indices = @transform_5, window_bounds = array<i64: 256, 256>}, {pipeline_mode = #tpu.pipeline_mode<synchronous>, transform_indices = @transform_6, window_bounds = array<i64: 1, 256>}, {pipeline_mode = #tpu.pipeline_mode<synchronous>, transform_indices = @transform_7, window_bounds = array<i64: 1, 256>}, {pipeline_mode = #tpu.pipeline_mode<synchronous>, transform_indices = @transform_8, window_bounds = array<i64: 1, 1>}, {transform_indices = @transform_9, window_bounds = array<i64: 8, 1>}]} {
    %c0 = arith.constant 0 : index
    %c0_0 = arith.constant 0 : index
    %0 = vector.load %arg1[%c0, %c0_0] : memref<8x16xf32, #tpu.memory_space<vmem>>, vector<8x16xf32>
    %1 = arith.truncf %0 : vector<8x16xf32> to vector<8x16xbf16>
    %c0_1 = arith.constant 0 : index
    %c0_2 = arith.constant 0 : index
    %2 = vector.load %arg3[%c0_1, %c0_2] : memref<16x256xbf16, #tpu.memory_space<vmem>>, vector<16x256xbf16>
    %cst = arith.constant dense<0.000000e+00> : vector<8x256xf32>
    %3 = tpu.matmul %1, %2, %cst {dimension_numbers = #tpu.dot_dimension_numbers<[1], [0], [0], [1], [0, 0, 1, 1], [], []>} : vector<8x16xbf16>, vector<16x256xbf16>, vector<8x256xf32> -> vector<8x256xf32>
    %c0_3 = arith.constant 0 : index
    %c0_4 = arith.constant 0 : index
    %4 = vector.load %arg2[%c0_3, %c0_4] : memref<8x8xf32, #tpu.memory_space<vmem>>, vector<8x8xf32>
    %5 = arith.truncf %4 : vector<8x8xf32> to vector<8x8xbf16>
    %c0_5 = arith.constant 0 : index
    %c0_6 = arith.constant 0 : index
    %6 = vector.load %arg4[%c0_5, %c0_6] : memref<8x256xbf16, #tpu.memory_space<vmem>>, vector<8x256xbf16>
    %cst_7 = arith.constant dense<0.000000e+00> : vector<8x256xf32>
    %7 = tpu.matmul %5, %6, %cst_7 {dimension_numbers = #tpu.dot_dimension_numbers<[1], [0], [0], [1], [0, 0, 1, 1], [], []>} : vector<8x8xbf16>, vector<8x256xbf16>, vector<8x256xf32> -> vector<8x256xf32>
    %8 = arith.addf %3, %7 : vector<8x256xf32>
    %c0_8 = arith.constant 0 : index
    %c0_9 = arith.constant 0 : index
    %9 = vector.load %arg5[%c0_8, %c0_9] : memref<1x256xf32, #tpu.memory_space<vmem>>, vector<1x256xf32>
    %10 = vector.broadcast %9 : vector<1x256xf32> to vector<8x256xf32>
    %11 = arith.addf %8, %10 : vector<8x256xf32>
    %cst_10 = arith.constant 0.000000e+00 : f32
    %12 = vector.broadcast %cst_10 : f32 to vector<8x256xf32>
    %13 = arith.maximumf %11, %12 : vector<8x256xf32>
    %14 = arith.truncf %13 : vector<8x256xf32> to vector<8x256xbf16>
    %c0_11 = arith.constant 0 : index
    %c0_12 = arith.constant 0 : index
    %15 = vector.load %arg6[%c0_11, %c0_12] : memref<256x256xbf16, #tpu.memory_space<vmem>>, vector<256x256xbf16>
    %cst_13 = arith.constant dense<0.000000e+00> : vector<8x256xf32>
    %16 = tpu.matmul %14, %15, %cst_13 {dimension_numbers = #tpu.dot_dimension_numbers<[1], [0], [0], [1], [0, 0, 1, 1], [], []>} : vector<8x256xbf16>, vector<256x256xbf16>, vector<8x256xf32> -> vector<8x256xf32>
    %c0_14 = arith.constant 0 : index
    %c0_15 = arith.constant 0 : index
    %17 = vector.load %arg7[%c0_14, %c0_15] : memref<1x256xf32, #tpu.memory_space<vmem>>, vector<1x256xf32>
    %18 = vector.broadcast %17 : vector<1x256xf32> to vector<8x256xf32>
    %19 = arith.addf %16, %18 : vector<8x256xf32>
    %cst_16 = arith.constant 0.000000e+00 : f32
    %20 = vector.broadcast %cst_16 : f32 to vector<8x256xf32>
    %21 = arith.maximumf %19, %20 : vector<8x256xf32>
    %c0_17 = arith.constant 0 : index
    %c0_18 = arith.constant 0 : index
    %22 = vector.load %arg8[%c0_17, %c0_18] : memref<1x256xf32, #tpu.memory_space<vmem>>, vector<1x256xf32>
    %23 = vector.broadcast %22 : vector<1x256xf32> to vector<8x256xf32>
    %24 = arith.mulf %21, %23 : vector<8x256xf32>
    %cst_19 = arith.constant dense<0.000000e+00> : vector<8xf32>
    %25 = vector.multi_reduction <add>, %24, %cst_19 [1] : vector<8x256xf32> to vector<8xf32>
    %26 = vector.shape_cast %25 : vector<8xf32> to vector<8x1xf32>
    %c0_20 = arith.constant 0 : index
    %c0_21 = arith.constant 0 : index
    %27 = vector.load %arg9[%c0_20, %c0_21] : memref<1x1xf32, #tpu.memory_space<vmem>>, vector<1x1xf32>
    %28 = vector.broadcast %27 : vector<1x1xf32> to vector<8x1xf32>
    %29 = arith.addf %26, %28 : vector<8x1xf32>
    %c0_22 = arith.constant 0 : index
    %c0_23 = arith.constant 0 : index
    %30 = vector.load %arg10[%c0_22, %c0_23] : memref<8x1xf32, #tpu.memory_space<vmem>>, vector<8x1xf32>
    tpu.vector_store %arg10[%c0_22, %c0_23], %29 {strides = array<i32>} : memref<8x1xf32, #tpu.memory_space<vmem>>, vector<8x1xf32>,
    return
  }
  func.func @transform_0(%arg0: i32) -> (i32, i32) {
    %c0_i32 = arith.constant 0 : i32
    %c0_i32_0 = arith.constant 0 : i32
    return %arg0, %c0_i32 : i32, i32
  }
  func.func @transform_1(%arg0: i32) -> (i32, i32) {
    %c0_i32 = arith.constant 0 : i32
    %c0_i32_0 = arith.constant 0 : i32
    return %arg0, %c0_i32 : i32, i32
  }
  func.func @transform_2(%arg0: i32) -> (i32, i32) {
    %c0_i32 = arith.constant 0 : i32
    %c0_i32_0 = arith.constant 0 : i32
    %c0_i32_1 = arith.constant 0 : i32
    return %c0_i32, %c0_i32_0 : i32, i32
  }
  func.func @transform_3(%arg0: i32) -> (i32, i32) {
    %c0_i32 = arith.constant 0 : i32
    %c0_i32_0 = arith.constant 0 : i32
    %c0_i32_1 = arith.constant 0 : i32
    return %c0_i32, %c0_i32_0 : i32, i32
  }
  func.func @transform_4(%arg0: i32) -> (i32, i32) {
    %c0_i32 = arith.constant 0 : i32
    %c0_i32_0 = arith.constant 0 : i32
    %c0_i32_1 = arith.constant 0 : i32
    return %c0_i32, %c0_i32_0 : i32, i32
  }
  func.func @transform_5(%arg0: i32) -> (i32, i32) {
    %c0_i32 = arith.constant 0 : i32
    %c0_i32_0 = arith.constant 0 : i32
    %c0_i32_1 = arith.constant 0 : i32
    return %c0_i32, %c0_i32_0 : i32, i32
  }
  func.func @transform_6(%arg0: i32) -> (i32, i32) {
    %c0_i32 = arith.constant 0 : i32
    %c0_i32_0 = arith.constant 0 : i32
    %c0_i32_1 = arith.constant 0 : i32
    return %c0_i32, %c0_i32_0 : i32, i32
  }
  func.func @transform_7(%arg0: i32) -> (i32, i32) {
    %c0_i32 = arith.constant 0 : i32
    %c0_i32_0 = arith.constant 0 : i32
    %c0_i32_1 = arith.constant 0 : i32
    return %c0_i32, %c0_i32_0 : i32, i32
  }
  func.func @transform_8(%arg0: i32) -> (i32, i32) {
    %c0_i32 = arith.constant 0 : i32
    %c0_i32_0 = arith.constant 0 : i32
    %c0_i32_1 = arith.constant 0 : i32
    return %c0_i32, %c0_i32_0 : i32, i32
  }
  func.func @transform_9(%arg0: i32) -> (i32, i32) {
    %c0_i32 = arith.constant 0 : i32
    %c0_i32_0 = arith.constant 0 : i32
    return %arg0, %c0_i32 : i32, i32
  }
}

</mosaic_0001>

<llo_original>
// kernel: tpu_custom_call.1
$region0: #{tpu_custom_call.1}
  #allocation0 [shape = 'u32[]', space=smem, size = 0x4, offset = 0x4, fixed_abs, tag = 'smem constant byte address 0x4 - core index']
  #allocation1 [shape = 'u32[72,128]{1,0:T(1,128)}', space=vmem, size = 0x9000, scoped, tag = 'internal scratch']
  #allocation2 [shape = 'f32[1,1]{1,0:T(1,128)S(1)}', space=vmem, size = 0x200, scoped, tag = 'scoped memory for tpu_custom_call.1']
  %s0 = inlined_call_operand.hbm [shape: f32[8,16], index: 0, kind: input, shape index: {}]
  %s1 = inlined_call_operand.hbm [shape: f32[8,8], index: 1, kind: input, shape index: {}]
  %s2 = inlined_call_operand.hbm [shape: bf16[16,256], index: 2, kind: input, shape index: {}]
  %s3 = inlined_call_operand.hbm [shape: bf16[8,256], index: 3, kind: input, shape index: {}]
  %s4 = inlined_call_operand.vmem [shape: f32[1,256], index: 4, kind: input, shape index: {}]
  %s5 = inlined_call_operand.hbm [shape: bf16[256,256], index: 5, kind: input, shape index: {}]
  %s6 = inlined_call_operand.vmem [shape: f32[1,256], index: 6, kind: input, shape index: {}]
  %s7 = inlined_call_operand.vmem [shape: f32[1,256], index: 7, kind: input, shape index: {}]
  %s8 = inlined_call_operand.<no memory space> [shape: f32[1,1], index: 8, kind: input, shape index: {}]
  %s9 = inlined_call_operand.vmem [shape: f32[8,1], index: 9, kind: output, shape index: {}]
  %s10 = sld [smem:[#allocation0]]
  $region66: #{tpu_custom_call.1} parent=0
    _
  %s12 = ssub.s32 1, %s10
  %s13 = scalar_select 0, %s12, %s10
  %v14 = vstv %s8
  %15 = vst [vmem:[#allocation2] sm:$0x1] %v14
  $region1: #{tpu_custom_call.1} parent=0
    #allocation3 [shape = 'u8[4096]{0}', space=vmem, size = 0x1000, scoped, tag = 'input window, operand 0, single buffered']
    #allocation4 [shape = 's32[1]{0}', space=sflag, size = 0x4, scoped, tag = 'scoped memory for tpu_custom_call.1']
    #allocation5 [shape = 'u8[4096]{0}', space=vmem, size = 0x1000, scoped, tag = 'input window, operand 1, single buffered']
    #allocation6 [shape = 's32[1]{0}', space=sflag, size = 0x4, scoped, tag = 'scoped memory for tpu_custom_call.1']
    #allocation7 [shape = 'u8[8192]{0}', space=vmem, size = 0x2000, scoped, tag = 'input window, operand 2, single buffered']
    #allocation8 [shape = 'u8[4096]{0}', space=vmem, size = 0x1000, scoped, tag = 'input window, operand 3, single buffered']
    #allocation9 [shape = 's32[1]{0}', space=sflag, size = 0x4, scoped, tag = 'scoped memory for tpu_custom_call.1']
    #allocation10 [shape = 'u8[131072]{0}', space=vmem, size = 0x20000, scoped, tag = 'input window, operand 5, single buffered']
    %16 = vsyncpa [#allocation4], 0
    %17 = vsyncpa [#allocation6], 0
    %18 = vsyncpa [#allocation9], 0
    // Predicated region
    $region2: #{tpu_custom_call.1} parent=1 // pred_check
      _
    $region3: #{tpu_custom_call.1} parent=1 // pred_check_branch
      %20 = sbr.rel (0) target = $region5
    $region4: #{tpu_custom_call.1} parent=1 // pred_region
      %22 = vsyncadd [#allocation4], 0
      %s24 = sshll.u32 %s0, 4
      %s25 = int_to_ptr.hbm [resolvable:$true] %s24
      %s26 = sshll.u32 [#allocation3], 4
      %s27 = int_to_ptr.vmem [resolvable:$true] %s26
      %29 = dma.hbm_to_vmem [thread:$0]  %s25, 128, %s27, [#allocation4]
    $region5: #{tpu_custom_call.1} parent=1 // pred_fallthru
      _
    // Predicated region
    $region6: #{tpu_custom_call.1} parent=1 // pred_check
      _
    $region7: #{tpu_custom_call.1} parent=1 // pred_check_branch
      %31 = sbr.rel (0) target = $region9
    $region8: #{tpu_custom_call.1} parent=1 // pred_region
      %33 = vsyncadd [#allocation6], 0
      %s35 = sshll.u32 %s1, 4
      %s36 = int_to_ptr.hbm [resolvable:$true] %s35
      %s37 = sshll.u32 [#allocation5], 4
      %s38 = int_to_ptr.vmem [resolvable:$true] %s37
      %40 = dma.hbm_to_vmem [thread:$0]  %s36, 128, %s38, [#allocation6]
    $region9: #{tpu_custom_call.1} parent=1 // pred_fallthru
      _
    // Predicated region
    $region10: #{tpu_custom_call.1} parent=1 // pred_check
      _
    $region11: #{tpu_custom_call.1} parent=1 // pred_check_branch
      %42 = sbr.rel (0) target = $region13
    $region12: #{tpu_custom_call.1} parent=1 // pred_region
      %44 = vsyncadd [#allocation6], 0
      %s45 = sshll.u32 %s2, 4
      %s46 = int_to_ptr.hbm [resolvable:$true] %s45
      %s47 = sshll.u32 [#allocation7], 4
      %s48 = int_to_ptr.vmem [resolvable:$true] %s47
      %53 = dma.hbm_to_vmem [thread:$0]  %s46, 256, %s48, [#allocation6], 128, 128, 8
    $region13: #{tpu_custom_call.1} parent=1 // pred_fallthru
      _
    // Predicated region
    $region14: #{tpu_custom_call.1} parent=1 // pred_check
      _
    $region15: #{tpu_custom_call.1} parent=1 // pred_check_branch
      %55 = sbr.rel (0) target = $region17
    $region16: #{tpu_custom_call.1} parent=1 // pred_region
      %57 = vsyncadd [#allocation9], 0
      %s59 = sshll.u32 %s3, 4
      %s60 = int_to_ptr.hbm [resolvable:$true] %s59
      %s61 = sshll.u32 [#allocation8], 4
      %s62 = int_to_ptr.vmem [resolvable:$true] %s61
      %64 = dma.hbm_to_vmem [thread:$0]  %s60, 128, %s62, [#allocation9]
    $region17: #{tpu_custom_call.1} parent=1 // pred_fallthru
      _
    // Predicated region
    $region18: #{tpu_custom_call.1} parent=1 // pred_check
      _
    $region19: #{tpu_custom_call.1} parent=1 // pred_check_branch
      %66 = sbr.rel (0) target = $region21
    $region20: #{tpu_custom_call.1} parent=1 // pred_region
      _
    $region21: #{tpu_custom_call.1} parent=1 // pred_fallthru
      _
    // Predicated region
    $region22: #{tpu_custom_call.1} parent=1 // pred_check
      _
    $region23: #{tpu_custom_call.1} parent=1 // pred_check_branch
      %68 = sbr.rel (0) target = $region25
    $region24: #{tpu_custom_call.1} parent=1 // pred_region
      %70 = vsyncadd [#allocation9], 0
      %s71 = sshll.u32 %s5, 4
      %s72 = int_to_ptr.hbm [resolvable:$true] %s71
      %s73 = sshll.u32 [#allocation10], 4
      %s74 = int_to_ptr.vmem [resolvable:$true] %s73
      %79 = dma.hbm_to_vmem [thread:$0]  %s72, 4096, %s74, [#allocation9], 128, 128, 8
    $region25: #{tpu_custom_call.1} parent=1 // pred_fallthru
      _
    // Predicated region
    $region26: #{tpu_custom_call.1} parent=1 // pred_check
      _
    $region27: #{tpu_custom_call.1} parent=1 // pred_check_branch
      %81 = sbr.rel (0) target = $region29
    $region28: #{tpu_custom_call.1} parent=1 // pred_region
      _
    $region29: #{tpu_custom_call.1} parent=1 // pred_fallthru
      _
    // Predicated region
    $region30: #{tpu_custom_call.1} parent=1 // pred_check
      _
    $region31: #{tpu_custom_call.1} parent=1 // pred_check_branch
      %83 = sbr.rel (0) target = $region33
    $region32: #{tpu_custom_call.1} parent=1 // pred_region
      _
    $region33: #{tpu_custom_call.1} parent=1 // pred_fallthru
      _
    // Predicated region
    $region34: #{tpu_custom_call.1} parent=1 // pred_check
      _
    $region35: #{tpu_custom_call.1} parent=1 // pred_check_branch
      %85 = sbr.rel (0) target = $region37
    $region36: #{tpu_custom_call.1} parent=1 // pred_region
      _
    $region37: #{tpu_custom_call.1} parent=1 // pred_fallthru
      _
    // Predicated region
    $region38: #{tpu_custom_call.1} parent=1 // pred_check
      _
    $region39: #{tpu_custom_call.1} parent=1 // pred_check_branch
      %87 = sbr.rel (0) target = $region41
    $region40: #{tpu_custom_call.1} parent=1 // pred_region
      %89 = dma.done [#allocation4], 128
    $region41: #{tpu_custom_call.1} parent=1 // pred_fallthru
      _
    // Predicated region
    $region42: #{tpu_custom_call.1} parent=1 // pred_check
      _
    $region43: #{tpu_custom_call.1} parent=1 // pred_check_branch
      %91 = sbr.rel (0) target = $region45
    $region44: #{tpu_custom_call.1} parent=1 // pred_region
      %93 = dma.done [#allocation6], 128
    $region45: #{tpu_custom_call.1} parent=1 // pred_fallthru
      _
    // Predicated region
    $region46: #{tpu_custom_call.1} parent=1 // pred_check
      _
    $region47: #{tpu_custom_call.1} parent=1 // pred_check_branch
      %95 = sbr.rel (0) target = $region49
    $region48: #{tpu_custom_call.1} parent=1 // pred_region
      %97 = dma.done [#allocation6], 256
    $region49: #{tpu_custom_call.1} parent=1 // pred_fallthru
      _
    // Predicated region
    $region50: #{tpu_custom_call.1} parent=1 // pred_check
      _
    $region51: #{tpu_custom_call.1} parent=1 // pred_check_branch
      %99 = sbr.rel (0) target = $region53
    $region52: #{tpu_custom_call.1} parent=1 // pred_region
      %101 = dma.done [#allocation9], 128
    $region53: #{tpu_custom_call.1} parent=1 // pred_fallthru
      _
    // Predicated region
    $region54: #{tpu_custom_call.1} parent=1 // pred_check
      _
    $region55: #{tpu_custom_call.1} parent=1 // pred_check_branch
      %103 = sbr.rel (0) target = $region57
    $region56: #{tpu_custom_call.1} parent=1 // pred_region
      %105 = dma.done [#allocation9], 4096
    $region57: #{tpu_custom_call.1} parent=1 // pred_fallthru
      _
    %v107 = vld [vmem:[#allocation3] sm:$0xff]
    %v108 = vpack.c.bf16 %v107, %v107
    %v109 = vld [vmem:[#allocation7] sm:$0xff]
    %v110 = vld [vmem:[#allocation7 + $0x8] sm:$0xff]
    %v111 = vld [vmem:[#allocation5] sm:$0xff]
    %v112 = vpack.c.bf16 %v111, %v111
    %v113 = vld [vmem:[#allocation8] sm:$0xff]
    %v115 = vunpack.c.l.b16 %v113
    %v116 = vunpack.c.h.b16 %v113
    %v117 = vpack.c.b16 %v115, %v115
    %v118 = vpack.c.b16 %v116, %v116
    %vm119 = vcmask 64512
    %v121 = vsel %vm119, %v112, 0
    %vm123 = vcmask 1043456
    %v125 = vsel %vm123, %v117, 0
    %v128 = vsel %vm123, %v118, 0
    %130 = vmatpush.bf16.msra.mxu0 0
    %131 = vmatpush.bf16.msra.mxu0 0
    %132 = vmatpush.bf16.msra.mxu0 0
    %133 = vmatpush.bf16.msra.mxu0 0
    %134 = vmatpush.bf16.msra.mxu0 0
    %135 = vmatpush.bf16.msra.mxu0 0
    %136 = vmatpush.bf16.msra.mxu0 0
    %137 = vmatpush.bf16.msra.mxu0 %v125
    %138 = vmatmul.bf16.gmra.mxu0 %v121
    %v139 = vpop.f32.mrf.mxu0
    %v140 = vadd.f32 0.0, %v139
    %v141 = vpop.f32.mrf.mxu0
    %142 = vdwg.mxu0
    %143 = vmatpush.bf16.msra.mxu0 0
    %144 = vmatpush.bf16.msra.mxu0 0
    %145 = vmatpush.bf16.msra.mxu0 0
    %146 = vmatpush.bf16.msra.mxu0 0
    %147 = vmatpush.bf16.msra.mxu0 0
    %148 = vmatpush.bf16.msra.mxu0 0
    %149 = vmatpush.bf16.msra.mxu0 0
    %150 = vmatpush.bf16.msra.mxu0 %v128
    %151 = vmatmul.bf16.gmra.mxu0 %v121
    %v152 = vpop.f32.mrf.mxu0
    %v153 = vadd.f32 0.0, %v152
    %v154 = vpop.f32.mrf.mxu0
    %155 = vdwg.mxu0
    %v158 = vunpack.c.l.b16 %v109
    %v159 = vunpack.c.h.b16 %v109
    %v160 = vunpack.c.l.b16 %v110
    %v161 = vunpack.c.h.b16 %v110
    %v162 = vpack.c.b16 %v160, %v158
    %v163 = vpack.c.b16 %v161, %v159
    %vm166 = vcmask 130048
    %v168 = vsel %vm166, %v108, 0
    %170 = vmatpush.bf16.msra.mxu0 0
    %171 = vmatpush.bf16.msra.mxu0 0
    %172 = vmatpush.bf16.msra.mxu0 0
    %173 = vmatpush.bf16.msra.mxu0 0
    %174 = vmatpush.bf16.msra.mxu0 0
    %175 = vmatpush.bf16.msra.mxu0 0
    %176 = vmatpush.bf16.msra.mxu0 0
    %177 = vmatpush.bf16.msra.mxu0 %v162
    %178 = vmatmul.bf16.gmra.mxu0 %v168
    %v179 = vpop.f32.mrf.mxu0
    %v180 = vadd.f32 %v140, %v179
    %v181 = vpop.f32.mrf.mxu0
    %182 = vdwg.mxu0
    %183 = vmatpush.bf16.msra.mxu0 0
    %184 = vmatpush.bf16.msra.mxu0 0
    %185 = vmatpush.bf16.msra.mxu0 0
    %186 = vmatpush.bf16.msra.mxu0 0
    %187 = vmatpush.bf16.msra.mxu0 0
    %188 = vmatpush.bf16.msra.mxu0 0
    %189 = vmatpush.bf16.msra.mxu0 0
    %190 = vmatpush.bf16.msra.mxu0 %v163
    %191 = vmatmul.bf16.gmra.mxu0 %v168
    %v192 = vpop.f32.mrf.mxu0
    %v193 = vadd.f32 %v153, %v192
    %v194 = vpop.f32.mrf.mxu0
    %195 = vdwg.mxu0
    %v196 = vld [vmem:[%s4] sm:$0x3]
    %v198 = vperm.slane %v196, 0
    %v199 = vperm.slane %v196, 1
    %v202 = vadd.f32 %v180, %v198
    %v203 = vadd.f32 %v193, %v199
    %v204 = vmax.f32 %v202, 0.0
    %v205 = vmax.f32 %v203, 0.0
    %v206 = vpack.c.bf16 %v204, %v204
    %v207 = vpack.c.bf16 %v205, %v205
    %v208 = vld [vmem:[#allocation10] sm:$0xff]
    %v209 = vld [vmem:[#allocation10 + $0x8] sm:$0xff]
    %v210 = vld [vmem:[#allocation10 + $0x10] sm:$0xff]
    %v211 = vld [vmem:[#allocation10 + $0x18] sm:$0xff]
    %v212 = vld [vmem:[#allocation10 + $0x20] sm:$0xff]
    %v213 = vld [vmem:[#allocation10 + $0x28] sm:$0xff]
    %v214 = vld [vmem:[#allocation10 + $0x30] sm:$0xff]
    %v215 = vld [vmem:[#allocation10 + $0x38] sm:$0xff]
    %v216 = vld [vmem:[#allocation10 + $0x40] sm:$0xff]
    %v217 = vld [vmem:[#allocation10 + $0x48] sm:$0xff]
    %v218 = vld [vmem:[#allocation10 + $0x50] sm:$0xff]
    %v219 = vld [vmem:[#allocation10 + $0x58] sm:$0xff]
    %v220 = vld [vmem:[#allocation10 + $0x60] sm:$0xff]
    %v221 = vld [vmem:[#allocation10 + $0x68] sm:$0xff]
    %v222 = vld [vmem:[#allocation10 + $0x70] sm:$0xff]
    %v223 = vld [vmem:[#allocation10 + $0x78] sm:$0xff]
    %v224 = vld [vmem:[#allocation10 + $0x80] sm:$0xff]
    %v225 = vld [vmem:[#allocation10 + $0x88] sm:$0xff]
    %v226 = vld [vmem:[#allocation10 + $0x90] sm:$0xff]
    %v227 = vld [vmem:[#allocation10 + $0x98] sm:$0xff]
    %v228 = vld [vmem:[#allocation10 + $0xa0] sm:$0xff]
    %v229 = vld [vmem:[#allocation10 + $0xa8] sm:$0xff]
    %v230 = vld [vmem:[#allocation10 + $0xb0] sm:$0xff]
    %v231 = vld [vmem:[#allocation10 + $0xb8] sm:$0xff]
    %v232 = vld [vmem:[#allocation10 + $0xc0] sm:$0xff]
    %v233 = vld [vmem:[#allocation10 + $0xc8] sm:$0xff]
    %v234 = vld [vmem:[#allocation10 + $0xd0] sm:$0xff]
    %v235 = vld [vmem:[#allocation10 + $0xd8] sm:$0xff]
    %v236 = vld [vmem:[#allocation10 + $0xe0] sm:$0xff]
    %v237 = vld [vmem:[#allocation10 + $0xe8] sm:$0xff]
    %v238 = vld [vmem:[#allocation10 + $0xf0] sm:$0xff]
    %v239 = vld [vmem:[#allocation10 + $0xf8] sm:$0xff]
    %v240 = vld [vmem:[%s6] sm:$0x3]
    %v242 = vperm.slane %v240, 0
    %v243 = vperm.slane %v240, 1
    %v278 = vunpack.c.l.b16 %v208
    %v279 = vunpack.c.h.b16 %v208
    %v280 = vunpack.c.l.b16 %v209
    %v281 = vunpack.c.h.b16 %v209
    %v282 = vunpack.c.l.b16 %v210
    %v283 = vunpack.c.h.b16 %v210
    %v284 = vunpack.c.l.b16 %v211
    %v285 = vunpack.c.h.b16 %v211
    %v286 = vunpack.c.l.b16 %v212
    %v287 = vunpack.c.h.b16 %v212
    %v288 = vunpack.c.l.b16 %v213
    %v289 = vunpack.c.h.b16 %v213
    %v290 = vunpack.c.l.b16 %v214
    %v291 = vunpack.c.h.b16 %v214
    %v292 = vunpack.c.l.b16 %v215
    %v293 = vunpack.c.h.b16 %v215
    %v294 = vunpack.c.l.b16 %v216
    %v295 = vunpack.c.h.b16 %v216
    %v296 = vunpack.c.l.b16 %v217
    %v297 = vunpack.c.h.b16 %v217
    %v298 = vunpack.c.l.b16 %v218
    %v299 = vunpack.c.h.b16 %v218
    %v300 = vunpack.c.l.b16 %v219
    %v301 = vunpack.c.h.b16 %v219
    %v302 = vunpack.c.l.b16 %v220
    %v303 = vunpack.c.h.b16 %v220
    %v304 = vunpack.c.l.b16 %v221
    %v305 = vunpack.c.h.b16 %v221
    %v306 = vunpack.c.l.b16 %v222
    %v307 = vunpack.c.h.b16 %v222
    %v308 = vunpack.c.l.b16 %v223
    %v309 = vunpack.c.h.b16 %v223
    %v310 = vunpack.c.l.b16 %v224
    %v311 = vunpack.c.h.b16 %v224
    %v312 = vunpack.c.l.b16 %v225
    %v313 = vunpack.c.h.b16 %v225
    %v314 = vunpack.c.l.b16 %v226
    %v315 = vunpack.c.h.b16 %v226
    %v316 = vunpack.c.l.b16 %v227
    %v317 = vunpack.c.h.b16 %v227
    %v318 = vunpack.c.l.b16 %v228
    %v319 = vunpack.c.h.b16 %v228
    %v320 = vunpack.c.l.b16 %v229
    %v321 = vunpack.c.h.b16 %v229
    %v322 = vunpack.c.l.b16 %v230
    %v323 = vunpack.c.h.b16 %v230
    %v324 = vunpack.c.l.b16 %v231
    %v325 = vunpack.c.h.b16 %v231
    %v326 = vunpack.c.l.b16 %v232
    %v327 = vunpack.c.h.b16 %v232
    %v328 = vunpack.c.l.b16 %v233
    %v329 = vunpack.c.h.b16 %v233
    %v330 = vunpack.c.l.b16 %v234
    %v331 = vunpack.c.h.b16 %v234
    %v332 = vunpack.c.l.b16 %v235
    %v333 = vunpack.c.h.b16 %v235
    %v334 = vunpack.c.l.b16 %v236
    %v335 = vunpack.c.h.b16 %v236
    %v336 = vunpack.c.l.b16 %v237
    %v337 = vunpack.c.h.b16 %v237
    %v338 = vunpack.c.l.b16 %v238
    %v339 = vunpack.c.h.b16 %v238
    %v340 = vunpack.c.l.b16 %v239
    %v341 = vunpack.c.h.b16 %v239
    %v342 = vpack.c.b16 %v280, %v278
    %v343 = vpack.c.b16 %v281, %v279
    %v344 = vpack.c.b16 %v284, %v282
    %v345 = vpack.c.b16 %v285, %v283
    %v346 = vpack.c.b16 %v288, %v286
    %v347 = vpack.c.b16 %v289, %v287
    %v348 = vpack.c.b16 %v292, %v290
    %v349 = vpack.c.b16 %v293, %v291
    %v350 = vpack.c.b16 %v296, %v294
    %v351 = vpack.c.b16 %v297, %v295
    %v352 = vpack.c.b16 %v300, %v298
    %v353 = vpack.c.b16 %v301, %v299
    %v354 = vpack.c.b16 %v304, %v302
    %v355 = vpack.c.b16 %v305, %v303
    %v356 = vpack.c.b16 %v308, %v306
    %v357 = vpack.c.b16 %v309, %v307
    %v358 = vpack.c.b16 %v312, %v310
    %v359 = vpack.c.b16 %v313, %v311
    %v360 = vpack.c.b16 %v316, %v314
    %v361 = vpack.c.b16 %v317, %v315
    %v362 = vpack.c.b16 %v320, %v318
    %v363 = vpack.c.b16 %v321, %v319
    %v364 = vpack.c.b16 %v324, %v322
    %v365 = vpack.c.b16 %v325, %v323
    %v366 = vpack.c.b16 %v328, %v326
    %v367 = vpack.c.b16 %v329, %v327
    %v368 = vpack.c.b16 %v332, %v330
    %v369 = vpack.c.b16 %v333, %v331
    %v370 = vpack.c.b16 %v336, %v334
    %v371 = vpack.c.b16 %v337, %v335
    %v372 = vpack.c.b16 %v340, %v338
    %v373 = vpack.c.b16 %v341, %v339
    %406 = vmatpush.bf16.msra.mxu0 %v356
    %407 = vmatpush.bf16.msra.mxu0 %v354
    %408 = vmatpush.bf16.msra.mxu0 %v352
    %409 = vmatpush.bf16.msra.mxu0 %v350
    %410 = vmatpush.bf16.msra.mxu0 %v348
    %411 = vmatpush.bf16.msra.mxu0 %v346
    %412 = vmatpush.bf16.msra.mxu0 %v344
    %413 = vmatpush.bf16.msra.mxu0 %v342
    %414 = vmatmul.bf16.gmra.mxu0 %v206
    %v415 = vpop.f32.mrf.mxu0
    %v416 = vadd.f32 %v242, %v415
    %v417 = vpop.f32.mrf.mxu0
    %418 = vdwg.mxu0
    %419 = vmatpush.bf16.msra.mxu0 %v372
    %420 = vmatpush.bf16.msra.mxu0 %v370
    %421 = vmatpush.bf16.msra.mxu0 %v368
    %422 = vmatpush.bf16.msra.mxu0 %v366
    %423 = vmatpush.bf16.msra.mxu0 %v364
    %424 = vmatpush.bf16.msra.mxu0 %v362
    %425 = vmatpush.bf16.msra.mxu0 %v360
    %426 = vmatpush.bf16.msra.mxu0 %v358
    %427 = vmatmul.bf16.gmra.mxu0 %v207
    %v428 = vpop.f32.mrf.mxu0
    %v429 = vadd.f32 %v416, %v428
    %v430 = vpop.f32.mrf.mxu0
    %431 = vdwg.mxu0
    %432 = vmatpush.bf16.msra.mxu0 %v357
    %433 = vmatpush.bf16.msra.mxu0 %v355
    %434 = vmatpush.bf16.msra.mxu0 %v353
    %435 = vmatpush.bf16.msra.mxu0 %v351
    %436 = vmatpush.bf16.msra.mxu0 %v349
    %437 = vmatpush.bf16.msra.mxu0 %v347
    %438 = vmatpush.bf16.msra.mxu0 %v345
    %439 = vmatpush.bf16.msra.mxu0 %v343
    %440 = vmatmul.bf16.gmra.mxu0 %v206
    %v441 = vpop.f32.mrf.mxu0
    %v442 = vadd.f32 %v243, %v441
    %v443 = vpop.f32.mrf.mxu0
    %444 = vdwg.mxu0
    %445 = vmatpush.bf16.msra.mxu0 %v373
    %446 = vmatpush.bf16.msra.mxu0 %v371
    %447 = vmatpush.bf16.msra.mxu0 %v369
    %448 = vmatpush.bf16.msra.mxu0 %v367
    %449 = vmatpush.bf16.msra.mxu0 %v365
    %450 = vmatpush.bf16.msra.mxu0 %v363
    %451 = vmatpush.bf16.msra.mxu0 %v361
    %452 = vmatpush.bf16.msra.mxu0 %v359
    %453 = vmatmul.bf16.gmra.mxu0 %v207
    %v454 = vpop.f32.mrf.mxu0
    %v455 = vadd.f32 %v442, %v454
    %v456 = vpop.f32.mrf.mxu0
    %457 = vdwg.mxu0
    %v458 = vmax.f32 %v429, 0.0
    %v459 = vmax.f32 %v455, 0.0
    %v460 = vld [vmem:[%s7] sm:$0x3]
    %v462 = vperm.slane %v460, 0
    %v463 = vperm.slane %v460, 1
    %v466 = vmul.f32 %v458, %v462
    %v467 = vmul.f32 %v459, %v463
    %v468 = vadd.f32 %v466, %v467
    %469 = vadd.xlane.f32.xlu0 %v468
    %v470 = vpop.xlane.xlu0 %469
    %v471 = vld [vmem:[#allocation2] sm:$0x1]
    %v473 = vperm.slane %v471, 0
    %v475 = vadd.f32 %v470, %v473
    %vm476 = vcmask 7168
    %477 = vst.msk [vmem:[%s9] sm:$0xff] %vm476, %v475
    // Predicated region
    $region58: #{tpu_custom_call.1} parent=1 // pred_check
      _
    $region59: #{tpu_custom_call.1} parent=1 // pred_check_branch
      %479 = sbr.rel (0) target = $region61
    $region60: #{tpu_custom_call.1} parent=1 // pred_region
      _
    $region61: #{tpu_custom_call.1} parent=1 // pred_fallthru
      _
    // Predicated region
    $region62: #{tpu_custom_call.1} parent=1 // pred_check
      _
    $region63: #{tpu_custom_call.1} parent=1 // pred_check_branch
      %481 = sbr.rel (0) target = $region65
    $region64: #{tpu_custom_call.1} parent=1 // pred_region
      _
    $region65: #{tpu_custom_call.1} parent=1 // pred_fallthru
      _
    %482 = vsyncpa [#allocation4], 1
    %483 = vsyncpa [#allocation6], 1
    %484 = vsyncpa [#allocation9], 1

</llo_original>
